<compile_context>
chip_gen: v7x
topology: tpu7x:2x2x1
jax: 0.10.0
libtpu: 0.0.40
codegen_flags: <defaults>
</compile_context>

<pallas_src>
import functools
import math

import jax
import jax.numpy as jnp
from jax import lax
from jax.experimental import pallas as pl
from jax.experimental.pallas import tpu as pltpu

BN_EPS = 1e-5
INV_SQRT2 = 0.7071067811865475


def _round_up(x, m):
    return ((x + m - 1) // m) * m


def _const_spec(block_shape):
    """Grid-invariant input: fetched once, kept single-buffered in VMEM."""
    return pl.BlockSpec(block_shape,
                        lambda *_: (0,) * len(block_shape),
                        pipeline_mode=pl.Buffered(1))


def _gcn_fused_kernel(a_ref, x_ref, *rest, num_layers):
    """All GCN layers for one batch element; activations never leave VMEM.

    rest = ([w, b, scale, shift] * num_layers, o_ref).  Both matmuls per
    layer are single 2-D MXU dots with bf16 (or f32) operands and f32
    accumulation; there is no per-batch loop or concatenate in the kernel.
    """
    o_ref = rest[4 * num_layers]
    x = x_ref[...]                                   # (n_pad, fin_pad[0]) f32
    for l in range(num_layers):
        w_ref, b_ref, s_ref, t_ref = rest[4 * l: 4 * l + 4]
        # Dropout is identity in eval mode.
        # Linear: one MXU matmul, MXU-dtype operands, f32 accumulation.
        h = jnp.dot(x.astype(w_ref.dtype), w_ref[...],
                    preferred_element_type=jnp.float32) + b_ref[...]
        # BatchNorm1d (eval): per-node affine, running stats pre-folded.
        h = h * s_ref[...] + t_ref[...]
        # Exact (erf) GELU -- matches torch.nn.GELU() default.
        # TODO(synk): tanh-approx GELU would route through the EUP slot.
        h = 0.5 * h * (1.0 + lax.erf(h * INV_SQRT2))
        # Propagation: out = A_hat @ h, one MXU matmul per layer.
        x = jnp.dot(a_ref[...], h.astype(a_ref.dtype),
                    preferred_element_type=jnp.float32)
    o_ref[...] = x.astype(o_ref.dtype)


def gcn_forward(x, a_hat, params, *, mxu_dtype=jnp.bfloat16):
    """Run the whole GCN in a single fused Pallas call (inference).

    x:      (B, N, F_in) float32
    a_hat:  (N, N) float32 normalized adjacency
    params: per layer (w (fin, fout), b (fout,), gamma (N,), beta (N,),
            running_mean (N,), running_var (N,)).
    mxu_dtype: dtype fed to the MXU (bf16 recommended; f32 for exactness).
    """
    B, N, f_in = x.shape
    L = len(params)
    dims = [f_in] + [p[0].shape[1] for p in params]
    f_pads = [_round_up(d, 128) for d in dims]       # per-layer lane-dense widths
    n_pad = _round_up(N, 16)                         # sublane-aligned (bf16-safe)

    # --- packing / padding glue (outside the hot path) ----------------------
    a_pad = jnp.zeros((n_pad, n_pad), jnp.float32).at[:N, :N].set(a_hat)
    a_pad = a_pad.astype(mxu_dtype)

    x_pad = jnp.zeros((B, n_pad, f_pads[0]), jnp.float32)
    x_pad = x_pad.at[:, :N, :f_in].set(x.astype(jnp.float32))
    x_flat = x_pad.reshape(B * n_pad, f_pads[0])

    layer_args, layer_specs = [], []
    for (w, b, gamma, beta, r_mean, r_var), fin_p, fout_p in zip(
            params, f_pads[:-1], f_pads[1:]):
        fin, fout = w.shape
        # Padded weight rows (>= fin) stay exactly zero (see invariant above).
        w_pad = jnp.zeros((fin_p, fout_p), jnp.float32).at[:fin, :fout].set(w)
        b_pad = jnp.zeros((1, fout_p), jnp.float32).at[0, :fout].set(b.reshape(-1))
        scale = gamma / jnp.sqrt(r_var + BN_EPS)          # BN eval fold
        shift = beta - r_mean * scale
        s_pad = jnp.zeros((n_pad, 1), jnp.float32).at[:N, 0].set(scale)
        t_pad = jnp.zeros((n_pad, 1), jnp.float32).at[:N, 0].set(shift)
        layer_args += [w_pad.astype(mxu_dtype), b_pad, s_pad, t_pad]
        layer_specs += [_const_spec((fin_p, fout_p)),
                        _const_spec((1, fout_p)),
                        _const_spec((n_pad, 1)),
                        _const_spec((n_pad, 1))]

    # --- VMEM budget: constants single-buffered, activation slabs double ----
    w_item = jnp.dtype(mxu_dtype).itemsize
    est = n_pad * n_pad * w_item                          # A_hat
    est += 2 * n_pad * f_pads[0] * 4                      # x block (x2 buffers)
    est += 2 * n_pad * f_pads[-1] * 4                     # out block (x2 buffers)
    for fin_p, fout_p in zip(f_pads[:-1], f_pads[1:]):
        est += fin_p * fout_p * w_item                    # weights
        est += 8 * fout_p * 4                             # bias (sublane-padded)
        est += 2 * n_pad * 128 * 4                        # scale/shift (lane-padded)
    est += 4 * n_pad * max(f_pads) * 4                    # in-flight activations
    vmem_limit = int(min(56 << 20, max(32 << 20, 2 * est)))  # <=56MiB: v7x headroom

    kernel = functools.partial(_gcn_fused_kernel, num_layers=L)

    out_flat = pl.pallas_call(
        kernel,
        out_shape=jax.ShapeDtypeStruct((B * n_pad, f_pads[-1]), jnp.float32),
        grid_spec=pltpu.PrefetchScalarGridSpec(
            num_scalar_prefetch=0,
            grid=(B,),                                    # 1 batch element / step
            in_specs=[_const_spec((n_pad, n_pad)),                     # A_hat
                      pl.BlockSpec((n_pad, f_pads[0]), lambda b: (b, 0))]  # x
                     + layer_specs,
            out_specs=pl.BlockSpec((n_pad, f_pads[-1]), lambda b: (b, 0)),
        ),
        compiler_params=pltpu.CompilerParams(
            dimension_semantics=("parallel",),
            vmem_limit_bytes=vmem_limit),
    )(a_pad, x_flat, *layer_args)

    out = out_flat.reshape(B, n_pad, f_pads[-1])
    return out[:, :N, :dims[-1]]


def build_normalized_adjacency(edge_index, node_num):
    """A_hat[row, col] += deg(row)^-0.5 * deg(col)^-0.5, deg computed from col.

    Matches the PyTorch module (no implicit self-loops).  Zero-degree nodes
    are guarded to 0 instead of producing inf/NaN.
    """
    row, col = edge_index[0], edge_index[1]
    deg = jnp.zeros((node_num,), jnp.float32).at[col].add(1.0)
    deg_inv_sqrt = jnp.where(deg > 0, deg ** -0.5, 0.0)
    norm = deg_inv_sqrt[row] * deg_inv_sqrt[col]
    a = jnp.zeros((node_num, node_num), jnp.float32).at[row, col].add(norm)
    return a


def init_gcn_params(key, layer_dims, node_num):
    """PyTorch-style Linear init; BN gamma=1, beta=0, running stats 0/1."""
    params = []
    for fin, fout in zip(layer_dims[:-1], layer_dims[1:]):
        key, kw, kb = jax.random.split(key, 3)
        bound = 1.0 / math.sqrt(float(fin))
        w = jax.random.uniform(kw, (fin, fout), jnp.float32, -bound, bound)
        b = jax.random.uniform(kb, (fout,), jnp.float32, -bound, bound)
        gamma = jnp.ones((node_num,), jnp.float32)
        beta = jnp.zeros((node_num,), jnp.float32)
        r_mean = jnp.zeros((node_num,), jnp.float32)
        r_var = jnp.ones((node_num,), jnp.float32)
        params.append((w, b, gamma, beta, r_mean, r_var))
    return params


def gcn_forward_ref(x, a_hat, params):
    """Pure-JAX f32 reference (eval-mode semantics) for validation."""
    for (w, b, gamma, beta, r_mean, r_var) in params:
        h = jnp.einsum("bnf,fo->bno", x, w) + b[None, None, :]
        inv = gamma / jnp.sqrt(r_var + BN_EPS)
        h = (h - r_mean[None, :, None]) * inv[None, :, None] + beta[None, :, None]
        h = jax.nn.gelu(h, approximate=False)
        x = jnp.einsum("mn,bno->bmo", a_hat, h)
    return x


if __name__ == "__main__":
    B = 2          # batch
    N = 16         # node_num (== BatchNorm1d num_features)
    F_IN = 8       # input_num
    F_HID = 32     # hidden_num
    F_OUT = 16     # out_num
    LAYERS = 2

    key = jax.random.PRNGKey(0)
    kx, kp = jax.random.split(key)

    # Graph: self-loops + directed ring -> every node has in-degree 2.
    nodes = jnp.arange(N, dtype=jnp.int32)
    row = jnp.concatenate([nodes, nodes])                    # destination
    col = jnp.concatenate([nodes, (nodes + 1) % N])          # source
    edge_index = jnp.stack([row, col])                       # (2, E)

    a_hat = build_normalized_adjacency(edge_index, N)

    layer_dims = [F_IN] + [F_HID] * (LAYERS - 1) + [F_OUT]
    params = init_gcn_params(kp, layer_dims, N)

    x = jax.random.normal(kx, (B, N, F_IN), jnp.float32)

    out = jax.block_until_ready(gcn_forward(x, a_hat, params))
    ref = gcn_forward_ref(x, a_hat, params)

    assert out.shape == (B, N, F_OUT)
    # Tolerance is deliberately loosened vs the f32 reference because the MXU
    # runs on bf16 operands (f32 accumulation) per the performance guidance.
    err = float(jnp.max(jnp.abs(out - ref)))
    assert jnp.allclose(out, ref, atol=5e-2, rtol=5e-2), (
        "mismatch vs JAX reference, max abs err = %e" % err)

    print("KERNEL_OK")
</pallas_src>

<mosaic_0001>
module attributes {stable_mosaic.version = 11 : i64} {
  func.func @_gcn_fused_kernel(%arg0: i32, %arg1: memref<16x16xbf16, #tpu.memory_space<vmem>>, %arg2: memref<16x128xf32, #tpu.memory_space<vmem>>, %arg3: memref<128x128xbf16, #tpu.memory_space<vmem>>, %arg4: memref<1x128xf32, #tpu.memory_space<vmem>>, %arg5: memref<16x1xf32, #tpu.memory_space<vmem>>, %arg6: memref<16x1xf32, #tpu.memory_space<vmem>>, %arg7: memref<128x128xbf16, #tpu.memory_space<vmem>>, %arg8: memref<1x128xf32, #tpu.memory_space<vmem>>, %arg9: memref<16x1xf32, #tpu.memory_space<vmem>>, %arg10: memref<16x1xf32, #tpu.memory_space<vmem>>, %arg11: memref<16x128xf32, #tpu.memory_space<vmem>>) attributes {dimension_semantics = [#tpu.dimension_semantics<parallel>], iteration_bounds = array<i64: 2>, scalar_prefetch = 0 : i64, scratch_operands = 0 : i64, tpu.core_type = #tpu.core_type<tc>, window_params = [{pipeline_mode = #tpu.pipeline_mode<synchronous>, transform_indices = @transform_0, window_bounds = array<i64: 16, 16>}, {transform_indices = @transform_1, window_bounds = array<i64: 16, 128>}, {pipeline_mode = #tpu.pipeline_mode<synchronous>, transform_indices = @transform_2, window_bounds = array<i64: 128, 128>}, {pipeline_mode = #tpu.pipeline_mode<synchronous>, transform_indices = @transform_3, window_bounds = array<i64: 1, 128>}, {pipeline_mode = #tpu.pipeline_mode<synchronous>, transform_indices = @transform_4, window_bounds = array<i64: 16, 1>}, {pipeline_mode = #tpu.pipeline_mode<synchronous>, transform_indices = @transform_5, window_bounds = array<i64: 16, 1>}, {pipeline_mode = #tpu.pipeline_mode<synchronous>, transform_indices = @transform_6, window_bounds = array<i64: 128, 128>}, {pipeline_mode = #tpu.pipeline_mode<synchronous>, transform_indices = @transform_7, window_bounds = array<i64: 1, 128>}, {pipeline_mode = #tpu.pipeline_mode<synchronous>, transform_indices = @transform_8, window_bounds = array<i64: 16, 1>}, {pipeline_mode = #tpu.pipeline_mode<synchronous>, transform_indices = @transform_9, window_bounds = array<i64: 16, 1>}, {transform_indices = @transform_10, window_bounds = array<i64: 16, 128>}]} {
    %c0 = arith.constant 0 : index
    %c0_0 = arith.constant 0 : index
    %0 = vector.load %arg2[%c0, %c0_0] : memref<16x128xf32, #tpu.memory_space<vmem>>, vector<16x128xf32>
    %1 = arith.truncf %0 : vector<16x128xf32> to vector<16x128xbf16>
    %c0_1 = arith.constant 0 : index
    %c0_2 = arith.constant 0 : index
    %2 = vector.load %arg3[%c0_1, %c0_2] : memref<128x128xbf16, #tpu.memory_space<vmem>>, vector<128x128xbf16>
    %cst = arith.constant dense<0.000000e+00> : vector<16x128xf32>
    %3 = tpu.matmul %1, %2, %cst {dimension_numbers = #tpu.dot_dimension_numbers<[1], [0], [0], [1], [0, 0, 1, 1], [], []>} : vector<16x128xbf16>, vector<128x128xbf16>, vector<16x128xf32> -> vector<16x128xf32>
    %c0_3 = arith.constant 0 : index
    %c0_4 = arith.constant 0 : index
    %4 = vector.load %arg4[%c0_3, %c0_4] : memref<1x128xf32, #tpu.memory_space<vmem>>, vector<1x128xf32>
    %5 = vector.broadcast %4 : vector<1x128xf32> to vector<16x128xf32>
    %6 = arith.addf %3, %5 : vector<16x128xf32>
    %c0_5 = arith.constant 0 : index
    %c0_6 = arith.constant 0 : index
    %7 = vector.load %arg5[%c0_5, %c0_6] : memref<16x1xf32, #tpu.memory_space<vmem>>, vector<16x1xf32>
    %8 = vector.broadcast %7 : vector<16x1xf32> to vector<16x128xf32>
    %9 = arith.mulf %6, %8 : vector<16x128xf32>
    %c0_7 = arith.constant 0 : index
    %c0_8 = arith.constant 0 : index
    %10 = vector.load %arg6[%c0_7, %c0_8] : memref<16x1xf32, #tpu.memory_space<vmem>>, vector<16x1xf32>
    %11 = vector.broadcast %10 : vector<16x1xf32> to vector<16x128xf32>
    %12 = arith.addf %9, %11 : vector<16x128xf32>
    %cst_9 = arith.constant 5.000000e-01 : f32
    %13 = vector.broadcast %cst_9 : f32 to vector<16x128xf32>
    %14 = arith.mulf %13, %12 : vector<16x128xf32>
    %cst_10 = arith.constant 0.707106769 : f32
    %15 = vector.broadcast %cst_10 : f32 to vector<16x128xf32>
    %16 = arith.mulf %12, %15 : vector<16x128xf32>
    %17 = math.erf %16 : vector<16x128xf32>
    %cst_11 = arith.constant 1.000000e+00 : f32
    %18 = vector.broadcast %cst_11 : f32 to vector<16x128xf32>
    %19 = arith.addf %18, %17 : vector<16x128xf32>
    %20 = arith.mulf %14, %19 : vector<16x128xf32>
    %c0_12 = arith.constant 0 : index
    %c0_13 = arith.constant 0 : index
    %21 = vector.load %arg1[%c0_12, %c0_13] : memref<16x16xbf16, #tpu.memory_space<vmem>>, vector<16x16xbf16>
    %22 = arith.truncf %20 : vector<16x128xf32> to vector<16x128xbf16>
    %cst_14 = arith.constant dense<0.000000e+00> : vector<16x128xf32>
    %23 = tpu.matmul %21, %22, %cst_14 {dimension_numbers = #tpu.dot_dimension_numbers<[1], [0], [0], [1], [0, 0, 1, 1], [], []>} : vector<16x16xbf16>, vector<16x128xbf16>, vector<16x128xf32> -> vector<16x128xf32>
    %24 = arith.truncf %23 : vector<16x128xf32> to vector<16x128xbf16>
    %c0_15 = arith.constant 0 : index
    %c0_16 = arith.constant 0 : index
    %25 = vector.load %arg7[%c0_15, %c0_16] : memref<128x128xbf16, #tpu.memory_space<vmem>>, vector<128x128xbf16>
    %cst_17 = arith.constant dense<0.000000e+00> : vector<16x128xf32>
    %26 = tpu.matmul %24, %25, %cst_17 {dimension_numbers = #tpu.dot_dimension_numbers<[1], [0], [0], [1], [0, 0, 1, 1], [], []>} : vector<16x128xbf16>, vector<128x128xbf16>, vector<16x128xf32> -> vector<16x128xf32>
    %c0_18 = arith.constant 0 : index
    %c0_19 = arith.constant 0 : index
    %27 = vector.load %arg8[%c0_18, %c0_19] : memref<1x128xf32, #tpu.memory_space<vmem>>, vector<1x128xf32>
    %28 = vector.broadcast %27 : vector<1x128xf32> to vector<16x128xf32>
    %29 = arith.addf %26, %28 : vector<16x128xf32>
    %c0_20 = arith.constant 0 : index
    %c0_21 = arith.constant 0 : index
    %30 = vector.load %arg9[%c0_20, %c0_21] : memref<16x1xf32, #tpu.memory_space<vmem>>, vector<16x1xf32>
    %31 = vector.broadcast %30 : vector<16x1xf32> to vector<16x128xf32>
    %32 = arith.mulf %29, %31 : vector<16x128xf32>
    %c0_22 = arith.constant 0 : index
    %c0_23 = arith.constant 0 : index
    %33 = vector.load %arg10[%c0_22, %c0_23] : memref<16x1xf32, #tpu.memory_space<vmem>>, vector<16x1xf32>
    %34 = vector.broadcast %33 : vector<16x1xf32> to vector<16x128xf32>
    %35 = arith.addf %32, %34 : vector<16x128xf32>
    %cst_24 = arith.constant 5.000000e-01 : f32
    %36 = vector.broadcast %cst_24 : f32 to vector<16x128xf32>
    %37 = arith.mulf %36, %35 : vector<16x128xf32>
    %cst_25 = arith.constant 0.707106769 : f32
    %38 = vector.broadcast %cst_25 : f32 to vector<16x128xf32>
    %39 = arith.mulf %35, %38 : vector<16x128xf32>
    %40 = math.erf %39 : vector<16x128xf32>
    %cst_26 = arith.constant 1.000000e+00 : f32
    %41 = vector.broadcast %cst_26 : f32 to vector<16x128xf32>
    %42 = arith.addf %41, %40 : vector<16x128xf32>
    %43 = arith.mulf %37, %42 : vector<16x128xf32>
    %c0_27 = arith.constant 0 : index
    %c0_28 = arith.constant 0 : index
    %44 = vector.load %arg1[%c0_27, %c0_28] : memref<16x16xbf16, #tpu.memory_space<vmem>>, vector<16x16xbf16>
    %45 = arith.truncf %43 : vector<16x128xf32> to vector<16x128xbf16>
    %cst_29 = arith.constant dense<0.000000e+00> : vector<16x128xf32>
    %46 = tpu.matmul %44, %45, %cst_29 {dimension_numbers = #tpu.dot_dimension_numbers<[1], [0], [0], [1], [0, 0, 1, 1], [], []>} : vector<16x16xbf16>, vector<16x128xbf16>, vector<16x128xf32> -> vector<16x128xf32>
    %c0_30 = arith.constant 0 : index
    %c0_31 = arith.constant 0 : index
    %47 = vector.load %arg11[%c0_30, %c0_31] : memref<16x128xf32, #tpu.memory_space<vmem>>, vector<16x128xf32>
    tpu.vector_store %arg11[%c0_30, %c0_31], %46 {strides = array<i32>} : memref<16x128xf32, #tpu.memory_space<vmem>>, vector<16x128xf32>,
    return
  }
  func.func @transform_0(%arg0: i32) -> (i32, i32) {
    %c0_i32 = arith.constant 0 : i32
    %c0_i32_0 = arith.constant 0 : i32
    %c0_i32_1 = arith.constant 0 : i32
    return %c0_i32, %c0_i32_0 : i32, i32
  }
  func.func @transform_1(%arg0: i32) -> (i32, i32) {
    %c0_i32 = arith.constant 0 : i32
    %c0_i32_0 = arith.constant 0 : i32
    return %arg0, %c0_i32 : i32, i32
  }
  func.func @transform_2(%arg0: i32) -> (i32, i32) {
    %c0_i32 = arith.constant 0 : i32
    %c0_i32_0 = arith.constant 0 : i32
    %c0_i32_1 = arith.constant 0 : i32
    return %c0_i32, %c0_i32_0 : i32, i32
  }
  func.func @transform_3(%arg0: i32) -> (i32, i32) {
    %c0_i32 = arith.constant 0 : i32
    %c0_i32_0 = arith.constant 0 : i32
    %c0_i32_1 = arith.constant 0 : i32
    return %c0_i32, %c0_i32_0 : i32, i32
  }
  func.func @transform_4(%arg0: i32) -> (i32, i32) {
    %c0_i32 = arith.constant 0 : i32
    %c0_i32_0 = arith.constant 0 : i32
    %c0_i32_1 = arith.constant 0 : i32
    return %c0_i32, %c0_i32_0 : i32, i32
  }
  func.func @transform_5(%arg0: i32) -> (i32, i32) {
    %c0_i32 = arith.constant 0 : i32
    %c0_i32_0 = arith.constant 0 : i32
    %c0_i32_1 = arith.constant 0 : i32
    return %c0_i32, %c0_i32_0 : i32, i32
  }
  func.func @transform_6(%arg0: i32) -> (i32, i32) {
    %c0_i32 = arith.constant 0 : i32
    %c0_i32_0 = arith.constant 0 : i32
    %c0_i32_1 = arith.constant 0 : i32
    return %c0_i32, %c0_i32_0 : i32, i32
  }
  func.func @transform_7(%arg0: i32) -> (i32, i32) {
    %c0_i32 = arith.constant 0 : i32
    %c0_i32_0 = arith.constant 0 : i32
    %c0_i32_1 = arith.constant 0 : i32
    return %c0_i32, %c0_i32_0 : i32, i32
  }
  func.func @transform_8(%arg0: i32) -> (i32, i32) {
    %c0_i32 = arith.constant 0 : i32
    %c0_i32_0 = arith.constant 0 : i32
    %c0_i32_1 = arith.constant 0 : i32
    return %c0_i32, %c0_i32_0 : i32, i32
  }
  func.func @transform_9(%arg0: i32) -> (i32, i32) {
    %c0_i32 = arith.constant 0 : i32
    %c0_i32_0 = arith.constant 0 : i32
    %c0_i32_1 = arith.constant 0 : i32
    return %c0_i32, %c0_i32_0 : i32, i32
  }
  func.func @transform_10(%arg0: i32) -> (i32, i32) {
    %c0_i32 = arith.constant 0 : i32
    %c0_i32_0 = arith.constant 0 : i32
    return %arg0, %c0_i32 : i32, i32
  }
}

</mosaic_0001>

<llo_original>
// kernel: tpu_custom_call.1
$region0: #{tpu_custom_call.1}
  #allocation0 [shape = 'u32[]', space=smem, size = 0x4, offset = 0x4, fixed_abs, tag = 'smem constant byte address 0x4 - core index']
  #allocation1 [shape = 'u32[144,128]{1,0:T(1,128)}', space=vmem, size = 0x12000, scoped, tag = 'internal scratch']
  %s0 = inlined_call_operand.vmem [shape: bf16[16,16], index: 0, kind: input, shape index: {}]
  %s1 = inlined_call_operand.hbm [shape: f32[32,128], index: 1, kind: input, shape index: {}]
  %s2 = inlined_call_operand.vmem [shape: bf16[128,128], index: 2, kind: input, shape index: {}]
  %s3 = inlined_call_operand.vmem [shape: f32[1,128], index: 3, kind: input, shape index: {}]
  %s4 = inlined_call_operand.vmem [shape: f32[16,1], index: 4, kind: input, shape index: {}]
  %s5 = inlined_call_operand.vmem [shape: f32[16,1], index: 5, kind: input, shape index: {}]
  %s6 = inlined_call_operand.hbm [shape: bf16[128,128], index: 6, kind: input, shape index: {}]
  %s7 = inlined_call_operand.vmem [shape: f32[1,128], index: 7, kind: input, shape index: {}]
  %s8 = inlined_call_operand.vmem [shape: f32[16,1], index: 8, kind: input, shape index: {}]
  %s9 = inlined_call_operand.vmem [shape: f32[16,1], index: 9, kind: input, shape index: {}]
  %s10 = inlined_call_operand.hbm [shape: f32[32,128], index: 10, kind: output, shape index: {}]
  %s11 = sld [smem:[#allocation0]]
  $region81: #{tpu_custom_call.1} parent=0
    _
  %s13 = ssub.s32 1, %s11
  %s14 = scalar_select 0, %s13, %s11
  $region1: #{tpu_custom_call.1} parent=0
    #allocation2 [shape = 'u8[16384]{0}', space=vmem, size = 0x4000, scoped, tag = 'input window, operand 1']
    #allocation3 [shape = 's32[2]{0}', space=sflag, size = 0x8, scoped, tag = 'scoped memory for tpu_custom_call.1']
    #allocation4 [shape = 's32[2]{0}', space=sflag, size = 0x8, scoped, tag = 'scoped memory for tpu_custom_call.1']
    #allocation5 [shape = 'u8[32768]{0}', space=vmem, size = 0x8000, scoped, tag = 'input window, operand 6, single buffered']
    #allocation6 [shape = 's32[1]{0}', space=sflag, size = 0x4, scoped, tag = 'scoped memory for tpu_custom_call.1']
    #allocation7 [shape = 'u8[16384]{0}', space=vmem, size = 0x4000, scoped, tag = 'output window, operand 0']
    %15 = vsyncpa [#allocation3], 0
    %s16 = scalar_lea.sflag [#allocation3], 1
    %17 = vsyncpa %s16, 0
    %18 = vsyncpa [#allocation6], 0
    %19 = vsyncpa [#allocation4], 0
    %s20 = scalar_lea.sflag [#allocation4], 1
    %21 = vsyncpa %s20, 0
    loop: start=0, step=1, limit=4
    $region2: #{tpu_custom_call.1} parent=1 // loop_pre_header
      _
    $region3: #{tpu_custom_call.1} parent=1 // loop_header
      %s23 = sphi 0, %s27
      %p24 = scmp.ge.s32.totalorder %s23, 4
      %s31 = sphi 0, %s31
      %s33 = sphi 0, %s31
      %s34 = sphi 0, %s33
      %s48 = sphi 0, %s34
      %s54 = sphi 0, %s56
      %s57 = sphi 0, %s54
      %s58 = sphi 0, %s57
      %s74 = sphi 0, %s58
      %s78 = sphi 0, %s78
      %s80 = sphi 0, %s78
      %s81 = sphi 0, %s80
      %s95 = sphi 0, %s81
      %s99 = sphi 0, %s99
      %s101 = sphi 0, %s99
      %s102 = sphi 0, %s101
      %s116 = sphi 0, %s102
      %s120 = sphi 0, %s120
      %s122 = sphi 0, %s120
      %s123 = sphi 0, %s122
      %s137 = sphi 0, %s123
      %s141 = sphi 0, %s141
      %s143 = sphi 0, %s141
      %s144 = sphi 0, %s143
      %s158 = sphi 0, %s144
      %s162 = sphi 0, %s162
      %s164 = sphi 0, %s162
      %s165 = sphi 0, %s164
      %s179 = sphi 0, %s165
      %s183 = sphi 0, %s183
      %s185 = sphi 0, %s183
      %s186 = sphi 0, %s185
      %s200 = sphi 0, %s186
      %s204 = sphi 0, %s204
      %s206 = sphi 0, %s204
      %s207 = sphi 0, %s206
      %s221 = sphi 0, %s207
      %s225 = sphi 0, %s225
      %s227 = sphi 0, %s225
      %s228 = sphi 0, %s227
      %s242 = sphi 0, %s228
      %s248 = sphi 0, %s250
      %s251 = sphi 0, %s248
      %s252 = sphi 0, %s251
      %s268 = sphi 0, %s252
    $region4: #{tpu_custom_call.1} parent=1 // loop_header_branch
      %26 = sbr.rel (%p24) target = $region8
    $region5: #{tpu_custom_call.1} parent=1 // loop_body
      %s28 = ssub.s32 %s23, 1
      %s29 = ssub.s32 %s23, 2
      %s30 = sadd.s32 %s23, 1
      %s32 = sadd.s32 %s31, 1
      %p35 = scmp.eq.s32.totalorder %s23, 1
      %p36 = scmp.ne.s32.totalorder %s31, %s33
      %p37 = scmp.eq.s32.totalorder %s23, 0
      %p38 = por %p36, %p37
      %p39 = scmp.ne.s32.totalorder %s31, %s33
      %p40 = scmp.eq.s32.totalorder %s28, 1
      %p41 = por %p39, %p40
      %p42 = scmp.ne.s32.totalorder %s33, %s34
      %p43 = scmp.eq.s32.totalorder %s28, 0
      %p44 = por %p42, %p43
      %p45 = scmp.ne.s32.totalorder %s33, %s34
      %p46 = scmp.eq.s32.totalorder %s29, 1
      %p47 = por %p45, %p46
      %p49 = scmp.ne.s32.totalorder %s34, %s48
      %p50 = scmp.eq.s32.totalorder %s29, 0
      %p51 = por %p49, %p50
      %s52 = ssub.s32 %s23, %s30
      %p53 = scmp.eq.s32.totalorder %s52, 0
      %s55 = sadd.s32 %s54, 1
      %s56 = scalar_select %p53, %s54, %s55
      %p59 = pneg %p53
      %p60 = scmp.eq.s32.totalorder %s23, 1
      %p61 = por %p59, %p60
      %p62 = scmp.ne.s32.totalorder %s54, %s57
      %p63 = scmp.eq.s32.totalorder %s23, 0
      %p64 = por %p62, %p63
      %p65 = scmp.ne.s32.totalorder %s54, %s57
      %p66 = scmp.eq.s32.totalorder %s28, 1
      %p67 = por %p65, %p66
      %p68 = scmp.ne.s32.totalorder %s57, %s58
      %p69 = scmp.eq.s32.totalorder %s28, 0
      %p70 = por %p68, %p69
      %p71 = scmp.ne.s32.totalorder %s57, %s58
      %p72 = scmp.eq.s32.totalorder %s29, 1
      %p73 = por %p71, %p72
      %p75 = scmp.ne.s32.totalorder %s58, %s74
      %p76 = scmp.eq.s32.totalorder %s29, 0
      %p77 = por %p75, %p76
      %s79 = sadd.s32 %s78, 1
      %p82 = scmp.eq.s32.totalorder %s23, 1
      %p83 = scmp.ne.s32.totalorder %s78, %s80
      %p84 = scmp.eq.s32.totalorder %s23, 0
      %p85 = por %p83, %p84
      %p86 = scmp.ne.s32.totalorder %s78, %s80
      %p87 = scmp.eq.s32.totalorder %s28, 1
      %p88 = por %p86, %p87
      %p89 = scmp.ne.s32.totalorder %s80, %s81
      %p90 = scmp.eq.s32.totalorder %s28, 0
      %p91 = por %p89, %p90
      %p92 = scmp.ne.s32.totalorder %s80, %s81
      %p93 = scmp.eq.s32.totalorder %s29, 1
      %p94 = por %p92, %p93
      %p96 = scmp.ne.s32.totalorder %s81, %s95
      %p97 = scmp.eq.s32.totalorder %s29, 0
      %p98 = por %p96, %p97
      %s100 = sadd.s32 %s99, 1
      %p103 = scmp.eq.s32.totalorder %s23, 1
      %p104 = scmp.ne.s32.totalorder %s99, %s101
      %p105 = scmp.eq.s32.totalorder %s23, 0
      %p106 = por %p104, %p105
      %p107 = scmp.ne.s32.totalorder %s99, %s101
      %p108 = scmp.eq.s32.totalorder %s28, 1
      %p109 = por %p107, %p108
      %p110 = scmp.ne.s32.totalorder %s101, %s102
      %p111 = scmp.eq.s32.totalorder %s28, 0
      %p112 = por %p110, %p111
      %p113 = scmp.ne.s32.totalorder %s101, %s102
      %p114 = scmp.eq.s32.totalorder %s29, 1
      %p115 = por %p113, %p114
      %p117 = scmp.ne.s32.totalorder %s102, %s116
      %p118 = scmp.eq.s32.totalorder %s29, 0
      %p119 = por %p117, %p118
      %s121 = sadd.s32 %s120, 1
      %p124 = scmp.eq.s32.totalorder %s23, 1
      %p125 = scmp.ne.s32.totalorder %s120, %s122
      %p126 = scmp.eq.s32.totalorder %s23, 0
      %p127 = por %p125, %p126
      %p128 = scmp.ne.s32.totalorder %s120, %s122
      %p129 = scmp.eq.s32.totalorder %s28, 1
      %p130 = por %p128, %p129
      %p131 = scmp.ne.s32.totalorder %s122, %s123
      %p132 = scmp.eq.s32.totalorder %s28, 0
      %p133 = por %p131, %p132
      %p134 = scmp.ne.s32.totalorder %s122, %s123
      %p135 = scmp.eq.s32.totalorder %s29, 1
      %p136 = por %p134, %p135
      %p138 = scmp.ne.s32.totalorder %s123, %s137
      %p139 = scmp.eq.s32.totalorder %s29, 0
      %p140 = por %p138, %p139
      %s142 = sadd.s32 %s141, 1
      %p145 = scmp.eq.s32.totalorder %s23, 1
      %p146 = scmp.ne.s32.totalorder %s141, %s143
      %p147 = scmp.eq.s32.totalorder %s23, 0
      %p148 = por %p146, %p147
      %p149 = scmp.ne.s32.totalorder %s141, %s143
      %p150 = scmp.eq.s32.totalorder %s28, 1
      %p151 = por %p149, %p150
      %p152 = scmp.ne.s32.totalorder %s143, %s144
      %p153 = scmp.eq.s32.totalorder %s28, 0
      %p154 = por %p152, %p153
      %p155 = scmp.ne.s32.totalorder %s143, %s144
      %p156 = scmp.eq.s32.totalorder %s29, 1
      %p157 = por %p155, %p156
      %p159 = scmp.ne.s32.totalorder %s144, %s158
      %p160 = scmp.eq.s32.totalorder %s29, 0
      %p161 = por %p159, %p160
      %s163 = sadd.s32 %s162, 1
      %p166 = scmp.eq.s32.totalorder %s23, 1
      %p167 = scmp.ne.s32.totalorder %s162, %s164
      %p168 = scmp.eq.s32.totalorder %s23, 0
      %p169 = por %p167, %p168
      %p170 = scmp.ne.s32.totalorder %s162, %s164
      %p171 = scmp.eq.s32.totalorder %s28, 1
      %p172 = por %p170, %p171
      %p173 = scmp.ne.s32.totalorder %s164, %s165
      %p174 = scmp.eq.s32.totalorder %s28, 0
      %p175 = por %p173, %p174
      %p176 = scmp.ne.s32.totalorder %s164, %s165
      %p177 = scmp.eq.s32.totalorder %s29, 1
      %p178 = por %p176, %p177
      %p180 = scmp.ne.s32.totalorder %s165, %s179
      %p181 = scmp.eq.s32.totalorder %s29, 0
      %p182 = por %p180, %p181
      %s184 = sadd.s32 %s183, 1
      %p187 = scmp.eq.s32.totalorder %s23, 1
      %p188 = scmp.ne.s32.totalorder %s183, %s185
      %p189 = scmp.eq.s32.totalorder %s23, 0
      %p190 = por %p188, %p189
      %p191 = scmp.ne.s32.totalorder %s183, %s185
      %p192 = scmp.eq.s32.totalorder %s28, 1
      %p193 = por %p191, %p192
      %p194 = scmp.ne.s32.totalorder %s185, %s186
      %p195 = scmp.eq.s32.totalorder %s28, 0
      %p196 = por %p194, %p195
      %p197 = scmp.ne.s32.totalorder %s185, %s186
      %p198 = scmp.eq.s32.totalorder %s29, 1
      %p199 = por %p197, %p198
      %p201 = scmp.ne.s32.totalorder %s186, %s200
      %p202 = scmp.eq.s32.totalorder %s29, 0
      %p203 = por %p201, %p202
      %s205 = sadd.s32 %s204, 1
      %p208 = scmp.eq.s32.totalorder %s23, 1
      %p209 = scmp.ne.s32.totalorder %s204, %s206
      %p210 = scmp.eq.s32.totalorder %s23, 0
      %p211 = por %p209, %p210
      %p212 = scmp.ne.s32.totalorder %s204, %s206
      %p213 = scmp.eq.s32.totalorder %s28, 1
      %p214 = por %p212, %p213
      %p215 = scmp.ne.s32.totalorder %s206, %s207
      %p216 = scmp.eq.s32.totalorder %s28, 0
      %p217 = por %p215, %p216
      %p218 = scmp.ne.s32.totalorder %s206, %s207
      %p219 = scmp.eq.s32.totalorder %s29, 1
      %p220 = por %p218, %p219
      %p222 = scmp.ne.s32.totalorder %s207, %s221
      %p223 = scmp.eq.s32.totalorder %s29, 0
      %p224 = por %p222, %p223
      %s226 = sadd.s32 %s225, 1
      %p229 = scmp.eq.s32.totalorder %s23, 1
      %p230 = scmp.ne.s32.totalorder %s225, %s227
      %p231 = scmp.eq.s32.totalorder %s23, 0
      %p232 = por %p230, %p231
      %p233 = scmp.ne.s32.totalorder %s225, %s227
      %p234 = scmp.eq.s32.totalorder %s28, 1
      %p235 = por %p233, %p234
      %p236 = scmp.ne.s32.totalorder %s227, %s228
      %p237 = scmp.eq.s32.totalorder %s28, 0
      %p238 = por %p236, %p237
      %p239 = scmp.ne.s32.totalorder %s227, %s228
      %p240 = scmp.eq.s32.totalorder %s29, 1
      %p241 = por %p239, %p240
      %p243 = scmp.ne.s32.totalorder %s228, %s242
      %p244 = scmp.eq.s32.totalorder %s29, 0
      %p245 = por %p243, %p244
      %s246 = ssub.s32 %s23, %s30
      %p247 = scmp.eq.s32.totalorder %s246, 0
      %s249 = sadd.s32 %s248, 1
      %s250 = scalar_select %p247, %s248, %s249
      %p253 = pneg %p247
      %p254 = scmp.eq.s32.totalorder %s23, 1
      %p255 = por %p253, %p254
      %p256 = scmp.ne.s32.totalorder %s248, %s251
      %p257 = scmp.eq.s32.totalorder %s23, 0
      %p258 = por %p256, %p257
      %p259 = scmp.ne.s32.totalorder %s248, %s251
      %p260 = scmp.eq.s32.totalorder %s28, 1
      %p261 = por %p259, %p260
      %p262 = scmp.ne.s32.totalorder %s251, %s252
      %p263 = scmp.eq.s32.totalorder %s28, 0
      %p264 = por %p262, %p263
      %p265 = scmp.ne.s32.totalorder %s251, %s252
      %p266 = scmp.eq.s32.totalorder %s29, 1
      %p267 = por %p265, %p266
      %p269 = scmp.ne.s32.totalorder %s252, %s268
      %p270 = scmp.eq.s32.totalorder %s29, 0
      %p271 = por %p269, %p270
      %p272 = scmp.le.s32.totalorder 1, %s23
      %p273 = scmp.lt.s32.totalorder %s23, 3
      %p274 = pnand %p272, %p273
      %p275 = pneg %p274
      // Predicated region
      $region9: #{tpu_custom_call.1} parent=5 // pred_check
        _
      $region10: #{tpu_custom_call.1} parent=5 // pred_check_branch
        %277 = sbr.rel (%p274) target = $region12
      $region11: #{tpu_custom_call.1} parent=5 // pred_region
        %s278 = ssub.s32 %s23, 1
        // Predicated region
        $region13: #{tpu_custom_call.1} parent=11 // pred_check
          %p279 = pneg %p44
        $region14: #{tpu_custom_call.1} parent=11 // pred_check_branch
          %281 = sbr.rel (%p279) target = $region16
        $region15: #{tpu_custom_call.1} parent=11 // pred_region
          _
        $region16: #{tpu_custom_call.1} parent=11 // pred_fallthru
          _
        // Predicated region
        $region17: #{tpu_custom_call.1} parent=11 // pred_check
          %p282 = pneg %p91
        $region18: #{tpu_custom_call.1} parent=11 // pred_check_branch
          %284 = sbr.rel (%p282) target = $region20
        $region19: #{tpu_custom_call.1} parent=11 // pred_region
          _
        $region20: #{tpu_custom_call.1} parent=11 // pred_fallthru
          _
        // Predicated region
        $region21: #{tpu_custom_call.1} parent=11 // pred_check
          %p285 = pneg %p112
        $region22: #{tpu_custom_call.1} parent=11 // pred_check_branch
          %287 = sbr.rel (%p285) target = $region24
        $region23: #{tpu_custom_call.1} parent=11 // pred_region
          _
        $region24: #{tpu_custom_call.1} parent=11 // pred_fallthru
          _
        // Predicated region
        $region25: #{tpu_custom_call.1} parent=11 // pred_check
          %p288 = pneg %p133
        $region26: #{tpu_custom_call.1} parent=11 // pred_check_branch
          %290 = sbr.rel (%p288) target = $region28
        $region27: #{tpu_custom_call.1} parent=11 // pred_region
          _
        $region28: #{tpu_custom_call.1} parent=11 // pred_fallthru
          _
        // Predicated region
        $region29: #{tpu_custom_call.1} parent=11 // pred_check
          %p291 = pneg %p154
        $region30: #{tpu_custom_call.1} parent=11 // pred_check_branch
          %293 = sbr.rel (%p291) target = $region32
        $region31: #{tpu_custom_call.1} parent=11 // pred_region
          _
        $region32: #{tpu_custom_call.1} parent=11 // pred_fallthru
          _
        // Predicated region
        $region33: #{tpu_custom_call.1} parent=11 // pred_check
          %p294 = pneg %p175
        $region34: #{tpu_custom_call.1} parent=11 // pred_check_branch
          %296 = sbr.rel (%p294) target = $region36
        $region35: #{tpu_custom_call.1} parent=11 // pred_region
          %s298 = ssub.s32 1024, 1024
          %299 = vsyncadd [#allocation6], %s298
          %s300 = sshll.u32 [#allocation5], 4
          %s301 = int_to_ptr.vmem [resolvable:$true] %s300
          %306 = dma.hbm_to_vmem [thread:$0]  %s6, 1024, %s301, [#allocation6], 64, 64, 4
        $region36: #{tpu_custom_call.1} parent=11 // pred_fallthru
          _
        // Predicated region
        $region37: #{tpu_custom_call.1} parent=11 // pred_check
          %p307 = pneg %p196
        $region38: #{tpu_custom_call.1} parent=11 // pred_check_branch
          %309 = sbr.rel (%p307) target = $region40
        $region39: #{tpu_custom_call.1} parent=11 // pred_region
          _
        $region40: #{tpu_custom_call.1} parent=11 // pred_fallthru
          _
        // Predicated region
        $region41: #{tpu_custom_call.1} parent=11 // pred_check
          %p310 = pneg %p217
        $region42: #{tpu_custom_call.1} parent=11 // pred_check_branch
          %312 = sbr.rel (%p310) target = $region44
        $region43: #{tpu_custom_call.1} parent=11 // pred_region
          _
        $region44: #{tpu_custom_call.1} parent=11 // pred_fallthru
          _
        // Predicated region
        $region45: #{tpu_custom_call.1} parent=11 // pred_check
          %p313 = pneg %p238
        $region46: #{tpu_custom_call.1} parent=11 // pred_check_branch
          %315 = sbr.rel (%p313) target = $region48
        $region47: #{tpu_custom_call.1} parent=11 // pred_region
          _
        $region48: #{tpu_custom_call.1} parent=11 // pred_fallthru
          _
      $region12: #{tpu_custom_call.1} parent=5 // pred_fallthru
        _
      %p316 = scmp.lt.s32.totalorder %s23, 2
      // Predicated region
      $region49: #{tpu_custom_call.1} parent=5 // pred_check
        %p317 = pneg %p316
      $region50: #{tpu_custom_call.1} parent=5 // pred_check_branch
        %319 = sbr.rel (%p317) target = $region52
      $region51: #{tpu_custom_call.1} parent=5 // pred_region
        // Predicated region
        $region53: #{tpu_custom_call.1} parent=51 // pred_check
          %p320 = pneg %p64
        $region54: #{tpu_custom_call.1} parent=51 // pred_check_branch
          %322 = sbr.rel (%p320) target = $region56
        $region55: #{tpu_custom_call.1} parent=51 // pred_region
          %s323 = sand.u32 %s54, 1
          %s324 = scalar_lea.sflag [#allocation3], %s323
          %s325 = sand.u32 %s54, 1
          %s326 = smul.addr %s325, 16
          %s327 = scalar_lea.vmem [#allocation2], %s326
          %s328 = smul.u32 2, %s23
          %s330 = ssub.s32 256, 256
          %331 = vsyncadd %s324, %s330
          %s332 = smul.addr %s328, 128
          %s333 = scalar_lea.hbm %s1, %s332
          %s334 = sshll.u32 %s327, 4
          %s335 = int_to_ptr.vmem [resolvable:$true] %s334
          %340 = dma.hbm_to_vmem [thread:$0]  %s333, 256, %s335, %s324, 128, 128, 8
        $region56: #{tpu_custom_call.1} parent=51 // pred_fallthru
          _
      $region52: #{tpu_custom_call.1} parent=5 // pred_fallthru
        _
      %p341 = scmp.le.s32.totalorder 1, %s23
      %p342 = scmp.lt.s32.totalorder %s23, 3
      %p343 = pnand %p341, %p342
      %p344 = pneg %p343
      // Predicated region
      $region57: #{tpu_custom_call.1} parent=5 // pred_check
        _
      $region58: #{tpu_custom_call.1} parent=5 // pred_check_branch
        %346 = sbr.rel (%p343) target = $region60
      $region59: #{tpu_custom_call.1} parent=5 // pred_region
        %s347 = ssub.s32 %s23, 1
        %s348 = sand.u32 %s57, 1
        %s349 = scalar_lea.sflag [#allocation3], %s348
        %s350 = sand.u32 %s57, 1
        %s351 = smul.addr %s350, 16
        %s352 = scalar_lea.vmem [#allocation2], %s351
        // Predicated region
        $region61: #{tpu_custom_call.1} parent=59 // pred_check
          %p353 = pneg %p70
        $region62: #{tpu_custom_call.1} parent=59 // pred_check_branch
          %355 = sbr.rel (%p353) target = $region64
        $region63: #{tpu_custom_call.1} parent=59 // pred_region
          %356 = dma.done %s349, 256
        $region64: #{tpu_custom_call.1} parent=59 // pred_fallthru
          _
        // Predicated region
        $region65: #{tpu_custom_call.1} parent=59 // pred_check
          %p357 = pneg %p175
        $region66: #{tpu_custom_call.1} parent=59 // pred_check_branch
          %359 = sbr.rel (%p357) target = $region68
        $region67: #{tpu_custom_call.1} parent=59 // pred_region
          %360 = dma.done [#allocation6], 1024
        $region68: #{tpu_custom_call.1} parent=59 // pred_fallthru
          _
        %p361 = pneg %p44
        %p362 = pneg %p41
        %s363 = sand.u32 %s57, 1
        %s364 = scalar_lea.sflag [#allocation3], %s363
        %s365 = sand.u32 %s57, 1
        %s366 = smul.addr %s365, 16
        %s367 = scalar_lea.vmem [#allocation2], %s366
        %p368 = pneg %p70
        %p369 = pneg %p67
        %p370 = pneg %p91
        %p371 = pneg %p88
        %p372 = pneg %p112
        %p373 = pneg %p109
        %p374 = pneg %p133
        %p375 = pneg %p130
        %p376 = pneg %p154
        %p377 = pneg %p151
        %p378 = pneg %p175
        %p379 = pneg %p172
        %p380 = pneg %p196
        %p381 = pneg %p193
        %p382 = pneg %p217
        %p383 = pneg %p214
        %p384 = pneg %p238
        %p385 = pneg %p235
        %p386 = pneg %p264
        %p387 = pneg %p261
        %s388 = sand.u32 %s251, 1
        %s389 = scalar_lea.sflag [#allocation4], %s388
        %s390 = sand.u32 %s251, 1
        %s391 = smul.addr %s390, 16
        %s392 = scalar_lea.vmem [#allocation7], %s391
        %s393 = smul.u32 2, %s28
        %s394 = smul.u32 2, %s28
        %v396 = vld [vmem:[%s352] sm:$0xff]
        %v397 = vld [vmem:[%s352 + $0x8] sm:$0xff]
        %v398 = vpack.c.bf16 %v397, %v396
        %v399 = vld [vmem:[%s2] sm:$0xf]
        %v400 = vld [vmem:[%s2 + $0x4] sm:$0xf]
        %v401 = vld [vmem:[%s2 + $0x8] sm:$0xf]
        %v402 = vld [vmem:[%s2 + $0xc] sm:$0xf]
        %v403 = vld [vmem:[%s2 + $0x10] sm:$0xf]
        %v404 = vld [vmem:[%s2 + $0x14] sm:$0xf]
        %v405 = vld [vmem:[%s2 + $0x18] sm:$0xf]
        %v406 = vld [vmem:[%s2 + $0x1c] sm:$0xf]
        %v407 = vld [vmem:[%s2 + $0x20] sm:$0xf]
        %v408 = vld [vmem:[%s2 + $0x24] sm:$0xf]
        %v409 = vld [vmem:[%s2 + $0x28] sm:$0xf]
        %v410 = vld [vmem:[%s2 + $0x2c] sm:$0xf]
        %v411 = vld [vmem:[%s2 + $0x30] sm:$0xf]
        %v412 = vld [vmem:[%s2 + $0x34] sm:$0xf]
        %v413 = vld [vmem:[%s2 + $0x38] sm:$0xf]
        %v414 = vld [vmem:[%s2 + $0x3c] sm:$0xf]
        %v415 = vld [vmem:[%s3] sm:$0x1]
        %v417 = vlaneseq
        %v418 = vshrl.u32 %v417, 7
        %v419 = vsub.s32 0, %v418
        %v420 = vrot.slane %v415, %v419
        %v438 = vunpack.c.l.b16 %v399
        %v439 = vunpack.c.l.b16 %v400
        %v440 = vunpack.c.l.b16 %v401
        %v441 = vunpack.c.l.b16 %v402
        %v442 = vunpack.c.l.b16 %v403
        %v443 = vunpack.c.l.b16 %v404
        %v444 = vunpack.c.l.b16 %v405
        %v445 = vunpack.c.l.b16 %v406
        %v446 = vunpack.c.l.b16 %v407
        %v447 = vunpack.c.l.b16 %v408
        %v448 = vunpack.c.l.b16 %v409
        %v449 = vunpack.c.l.b16 %v410
        %v450 = vunpack.c.l.b16 %v411
        %v451 = vunpack.c.l.b16 %v412
        %v452 = vunpack.c.l.b16 %v413
        %v453 = vunpack.c.l.b16 %v414
        %v454 = vpack.c.b16 %v439, %v438
        %v455 = vpack.c.b16 %v441, %v440
        %v456 = vpack.c.b16 %v443, %v442
        %v457 = vpack.c.b16 %v445, %v444
        %v458 = vpack.c.b16 %v447, %v446
        %v459 = vpack.c.b16 %v449, %v448
        %v460 = vpack.c.b16 %v451, %v450
        %v461 = vpack.c.b16 %v453, %v452
        %470 = vmatprep.subr.bf16.mxu0 0
        %471 = vmatpush1.bf16.msra.mxu0 %v454
        %472 = vmatprep.subr.bf16.mxu0 0
        %473 = vmatpush1.bf16.msra.mxu0 %v455
        %474 = vmatprep.subr.bf16.mxu0 0
        %475 = vmatpush1.bf16.msra.mxu0 %v456
        %476 = vmatprep.subr.bf16.mxu0 0
        %477 = vmatpush1.bf16.msra.mxu0 %v457
        %478 = vmatprep.subr.bf16.mxu0 0
        %479 = vmatpush1.bf16.msra.mxu0 %v458
        %480 = vmatprep.subr.bf16.mxu0 0
        %481 = vmatpush1.bf16.msra.mxu0 %v459
        %482 = vmatprep.subr.bf16.mxu0 0
        %483 = vmatpush1.bf16.msra.mxu0 %v460
        %484 = vmatprep.subr.bf16.mxu0 0
        %485 = vmatpush1.bf16.msra.mxu0 %v461
        %486 = vmatprep.subr.bf16.mxu0 0
        %487 = vmatpush1.bf16.msra.mxu0 0
        %488 = vmatprep.subr.bf16.mxu0 0
        %489 = vmatpush1.bf16.msra.mxu0 0
        %490 = vmatprep.subr.bf16.mxu0 0
        %491 = vmatpush1.bf16.msra.mxu0 0
        %492 = vmatprep.subr.bf16.mxu0 0
        %493 = vmatpush1.bf16.msra.mxu0 0
        %494 = vmatprep.subr.bf16.mxu0 0
        %495 = vmatpush1.bf16.msra.mxu0 0
        %496 = vmatprep.subr.bf16.mxu0 0
        %497 = vmatpush1.bf16.msra.mxu0 0
        %498 = vmatprep.subr.bf16.mxu0 0
        %499 = vmatpush1.bf16.msra.mxu0 0
        %500 = vmatprep.subr.bf16.mxu0 0
        %501 = vmatpush1.bf16.msra.mxu0 0
        %502 = vmatprep.mubr.bf16.mxu0 0
        %503 = vmatmul.mubr.bf16.gmra.mrb[0].mxu0 %v398
        %v504 = vpop.f32.mrb[0].mxu0
        %v505 = vadd.f32 %v420, %v504
        %v506 = vpop.f32.mrb[0].mxu0
        %v507 = vpop.f32.mrb[0].mxu0
        %v508 = vadd.f32 %v420, %v507
        %v509 = vpop.f32.mrb[0].mxu0
        %510 = vdwg.mxu0
        %v511 = vld [vmem:[%s4] sm:$0xff]
        %v512 = vld [vmem:[%s4 + $0x8] sm:$0xff]
        %514 = vset.pattern.permute.xlu0 0
        %515 = vperm.xlu0 %514, %v511
        %v516 = vpop.permute.xlu0 %515
        %519 = vset.pattern.permute.xlu0 0
        %520 = vperm.xlu0 %519, %v512
        %v521 = vpop.permute.xlu0 %520
        %v523 = vmul.f32 %v505, %v516
        %v524 = vmul.f32 %v508, %v521
        %v525 = vld [vmem:[%s5] sm:$0xff]
        %v526 = vld [vmem:[%s5 + $0x8] sm:$0xff]
        %528 = vset.pattern.permute.xlu0 0
        %529 = vperm.xlu0 %528, %v525
        %v530 = vpop.permute.xlu0 %529
        %533 = vset.pattern.permute.xlu0 0
        %534 = vperm.xlu0 %533, %v526
        %v535 = vpop.permute.xlu0 %534
        %v537 = vadd.f32 %v523, %v530
        %v538 = vadd.f32 %v524, %v535
        %v539 = vmul.f32 %v537, 0.5
        %v540 = vmul.f32 %v538, 0.5
        %v541 = vmul.f32 %v537, 0.70710677
        %v542 = vmul.f32 %v538, 0.70710677
        %v543 = verf.f32.pop %v541
        %v544 = verf.f32.pop %v542
        %v545 = vadd.f32 %v543, 1.0
        %v546 = vadd.f32 %v544, 1.0
        %v547 = vmul.f32 %v539, %v545
        %v548 = vmul.f32 %v540, %v546
        %v549 = vld [vmem:[%s0] sm:$0xf]
        %v550 = vld [vmem:[%s0 + $0x4] sm:$0xf]
        %v551 = vpack.c.bf16 %v548, %v547
        %v554 = vunpack.c.l.b16 %v549
        %v555 = vunpack.c.l.b16 %v550
        %v556 = vpack.c.b16 %v555, %v554
        %vm557 = vcmask 130048
        %v559 = vsel %vm557, %v556, 0
        %561 = vmatprep.subr.bf16.mxu0 0
        %562 = vmatpush1.bf16.msra.mxu0 %v551
        %563 = vmatprep.subr.bf16.mxu0 0
        %564 = vmatpush1.bf16.msra.mxu0 0
        %565 = vmatprep.subr.bf16.mxu0 0
        %566 = vmatpush1.bf16.msra.mxu0 0
        %567 = vmatprep.subr.bf16.mxu0 0
        %568 = vmatpush1.bf16.msra.mxu0 0
        %569 = vmatprep.subr.bf16.mxu0 0
        %570 = vmatpush1.bf16.msra.mxu0 0
        %571 = vmatprep.subr.bf16.mxu0 0
        %572 = vmatpush1.bf16.msra.mxu0 0
        %573 = vmatprep.subr.bf16.mxu0 0
        %574 = vmatpush1.bf16.msra.mxu0 0
        %575 = vmatprep.subr.bf16.mxu0 0
        %576 = vmatpush1.bf16.msra.mxu0 0
        %577 = vmatprep.subr.bf16.mxu0 0
        %578 = vmatpush1.bf16.msra.mxu0 0
        %579 = vmatprep.subr.bf16.mxu0 0
        %580 = vmatpush1.bf16.msra.mxu0 0
        %581 = vmatprep.subr.bf16.mxu0 0
        %582 = vmatpush1.bf16.msra.mxu0 0
        %583 = vmatprep.subr.bf16.mxu0 0
        %584 = vmatpush1.bf16.msra.mxu0 0
        %585 = vmatprep.subr.bf16.mxu0 0
        %586 = vmatpush1.bf16.msra.mxu0 0
        %587 = vmatprep.subr.bf16.mxu0 0
        %588 = vmatpush1.bf16.msra.mxu0 0
        %589 = vmatprep.subr.bf16.mxu0 0
        %590 = vmatpush1.bf16.msra.mxu0 0
        %591 = vmatprep.subr.bf16.mxu0 0
        %592 = vmatpush1.bf16.msra.mxu0 0
        %593 = vmatprep.mubr.bf16.mxu0 0
        %594 = vmatmul.mubr.bf16.gmra.mrb[0].mxu0 %v559
        %v595 = vpop.f32.mrb[0].mxu0
        %v596 = vadd.f32 0.0, %v595
        %v597 = vpop.f32.mrb[0].mxu0
        %v598 = vpop.f32.mrb[0].mxu0
        %v599 = vadd.f32 0.0, %v598
        %v600 = vpop.f32.mrb[0].mxu0
        %601 = vdwg.mxu0
        %v602 = vpack.c.bf16 %v599, %v596
        %v603 = vld [vmem:[#allocation5] sm:$0xf]
        %v604 = vld [vmem:[#allocation5 + $0x4] sm:$0xf]
        %v605 = vld [vmem:[#allocation5 + $0x8] sm:$0xf]
        %v606 = vld [vmem:[#allocation5 + $0xc] sm:$0xf]
        %v607 = vld [vmem:[#allocation5 + $0x10] sm:$0xf]
        %v608 = vld [vmem:[#allocation5 + $0x14] sm:$0xf]
        %v609 = vld [vmem:[#allocation5 + $0x18] sm:$0xf]
        %v610 = vld [vmem:[#allocation5 + $0x1c] sm:$0xf]
        %v611 = vld [vmem:[#allocation5 + $0x20] sm:$0xf]
        %v612 = vld [vmem:[#allocation5 + $0x24] sm:$0xf]
        %v613 = vld [vmem:[#allocation5 + $0x28] sm:$0xf]
        %v614 = vld [vmem:[#allocation5 + $0x2c] sm:$0xf]
        %v615 = vld [vmem:[#allocation5 + $0x30] sm:$0xf]
        %v616 = vld [vmem:[#allocation5 + $0x34] sm:$0xf]
        %v617 = vld [vmem:[#allocation5 + $0x38] sm:$0xf]
        %v618 = vld [vmem:[#allocation5 + $0x3c] sm:$0xf]
        %v619 = vld [vmem:[%s7] sm:$0x1]
        %v621 = vlaneseq
        %v622 = vshrl.u32 %v621, 7
        %v623 = vsub.s32 0, %v622
        %v624 = vrot.slane %v619, %v623
        %v642 = vunpack.c.l.b16 %v603
        %v643 = vunpack.c.l.b16 %v604
        %v644 = vunpack.c.l.b16 %v605
        %v645 = vunpack.c.l.b16 %v606
        %v646 = vunpack.c.l.b16 %v607
        %v647 = vunpack.c.l.b16 %v608
        %v648 = vunpack.c.l.b16 %v609
        %v649 = vunpack.c.l.b16 %v610
        %v650 = vunpack.c.l.b16 %v611
        %v651 = vunpack.c.l.b16 %v612
        %v652 = vunpack.c.l.b16 %v613
        %v653 = vunpack.c.l.b16 %v614
        %v654 = vunpack.c.l.b16 %v615
        %v655 = vunpack.c.l.b16 %v616
        %v656 = vunpack.c.l.b16 %v617
        %v657 = vunpack.c.l.b16 %v618
        %v658 = vpack.c.b16 %v643, %v642
        %v659 = vpack.c.b16 %v645, %v644
        %v660 = vpack.c.b16 %v647, %v646
        %v661 = vpack.c.b16 %v649, %v648
        %v662 = vpack.c.b16 %v651, %v650
        %v663 = vpack.c.b16 %v653, %v652
        %v664 = vpack.c.b16 %v655, %v654
        %v665 = vpack.c.b16 %v657, %v656
        %674 = vmatprep.subr.bf16.mxu0 0
        %675 = vmatpush1.bf16.msra.mxu0 %v658
        %676 = vmatprep.subr.bf16.mxu0 0
        %677 = vmatpush1.bf16.msra.mxu0 %v659
        %678 = vmatprep.subr.bf16.mxu0 0
        %679 = vmatpush1.bf16.msra.mxu0 %v660
        %680 = vmatprep.subr.bf16.mxu0 0
        %681 = vmatpush1.bf16.msra.mxu0 %v661
        %682 = vmatprep.subr.bf16.mxu0 0
        %683 = vmatpush1.bf16.msra.mxu0 %v662
        %684 = vmatprep.subr.bf16.mxu0 0
        %685 = vmatpush1.bf16.msra.mxu0 %v663
        %686 = vmatprep.subr.bf16.mxu0 0
        %687 = vmatpush1.bf16.msra.mxu0 %v664
        %688 = vmatprep.subr.bf16.mxu0 0
        %689 = vmatpush1.bf16.msra.mxu0 %v665
        %690 = vmatprep.subr.bf16.mxu0 0
        %691 = vmatpush1.bf16.msra.mxu0 0
        %692 = vmatprep.subr.bf16.mxu0 0
        %693 = vmatpush1.bf16.msra.mxu0 0
        %694 = vmatprep.subr.bf16.mxu0 0
        %695 = vmatpush1.bf16.msra.mxu0 0
        %696 = vmatprep.subr.bf16.mxu0 0
        %697 = vmatpush1.bf16.msra.mxu0 0
        %698 = vmatprep.subr.bf16.mxu0 0
        %699 = vmatpush1.bf16.msra.mxu0 0
        %700 = vmatprep.subr.bf16.mxu0 0
        %701 = vmatpush1.bf16.msra.mxu0 0
        %702 = vmatprep.subr.bf16.mxu0 0
        %703 = vmatpush1.bf16.msra.mxu0 0
        %704 = vmatprep.subr.bf16.mxu0 0
        %705 = vmatpush1.bf16.msra.mxu0 0
        %706 = vmatprep.mubr.bf16.mxu0 0
        %707 = vmatmul.mubr.bf16.gmra.mrb[0].mxu0 %v602
        %v708 = vpop.f32.mrb[0].mxu0
        %v709 = vadd.f32 %v624, %v708
        %v710 = vpop.f32.mrb[0].mxu0
        %v711 = vpop.f32.mrb[0].mxu0
        %v712 = vadd.f32 %v624, %v711
        %v713 = vpop.f32.mrb[0].mxu0
        %714 = vdwg.mxu0
        %v715 = vld [vmem:[%s8] sm:$0xff]
        %v716 = vld [vmem:[%s8 + $0x8] sm:$0xff]
        %718 = vset.pattern.permute.xlu0 0
        %719 = vperm.xlu0 %718, %v715
        %v720 = vpop.permute.xlu0 %719
        %723 = vset.pattern.permute.xlu0 0
        %724 = vperm.xlu0 %723, %v716
        %v725 = vpop.permute.xlu0 %724
        %v727 = vmul.f32 %v709, %v720
        %v728 = vmul.f32 %v712, %v725
        %v729 = vld [vmem:[%s9] sm:$0xff]
        %v730 = vld [vmem:[%s9 + $0x8] sm:$0xff]
        %732 = vset.pattern.permute.xlu0 0
        %733 = vperm.xlu0 %732, %v729
        %v734 = vpop.permute.xlu0 %733
        %737 = vset.pattern.permute.xlu0 0
        %738 = vperm.xlu0 %737, %v730
        %v739 = vpop.permute.xlu0 %738
        %v741 = vadd.f32 %v727, %v734
        %v742 = vadd.f32 %v728, %v739
        %v743 = vmul.f32 %v741, 0.5
        %v744 = vmul.f32 %v742, 0.5
        %v745 = vmul.f32 %v741, 0.70710677
        %v746 = vmul.f32 %v742, 0.70710677
        %v747 = verf.f32.pop %v745
        %v748 = verf.f32.pop %v746
        %v749 = vadd.f32 %v747, 1.0
        %v750 = vadd.f32 %v748, 1.0
        %v751 = vmul.f32 %v743, %v749
        %v752 = vmul.f32 %v744, %v750
        %v753 = vpack.c.bf16 %v752, %v751
        %754 = vmatprep.subr.bf16.mxu0 0
        %755 = vmatpush1.bf16.msra.mxu0 %v753
        %756 = vmatprep.subr.bf16.mxu0 0
        %757 = vmatpush1.bf16.msra.mxu0 0
        %758 = vmatprep.subr.bf16.mxu0 0
        %759 = vmatpush1.bf16.msra.mxu0 0
        %760 = vmatprep.subr.bf16.mxu0 0
        %761 = vmatpush1.bf16.msra.mxu0 0
        %762 = vmatprep.subr.bf16.mxu0 0
        %763 = vmatpush1.bf16.msra.mxu0 0
        %764 = vmatprep.subr.bf16.mxu0 0
        %765 = vmatpush1.bf16.msra.mxu0 0
        %766 = vmatprep.subr.bf16.mxu0 0
        %767 = vmatpush1.bf16.msra.mxu0 0
        %768 = vmatprep.subr.bf16.mxu0 0
        %769 = vmatpush1.bf16.msra.mxu0 0
        %770 = vmatprep.subr.bf16.mxu0 0
        %771 = vmatpush1.bf16.msra.mxu0 0
        %772 = vmatprep.subr.bf16.mxu0 0
        %773 = vmatpush1.bf16.msra.mxu0 0
        %774 = vmatprep.subr.bf16.mxu0 0
        %775 = vmatpush1.bf16.msra.mxu0 0
        %776 = vmatprep.subr.bf16.mxu0 0
        %777 = vmatpush1.bf16.msra.mxu0 0
        %778 = vmatprep.subr.bf16.mxu0 0
        %779 = vmatpush1.bf16.msra.mxu0 0
        %780 = vmatprep.subr.bf16.mxu0 0
        %781 = vmatpush1.bf16.msra.mxu0 0
        %782 = vmatprep.subr.bf16.mxu0 0
        %783 = vmatpush1.bf16.msra.mxu0 0
        %784 = vmatprep.subr.bf16.mxu0 0
        %785 = vmatpush1.bf16.msra.mxu0 0
        %786 = vmatprep.mubr.bf16.mxu0 0
        %787 = vmatmul.mubr.bf16.gmra.mrb[0].mxu0 %v559
        %v788 = vpop.f32.mrb[0].mxu0
        %v789 = vadd.f32 0.0, %v788
        %v790 = vpop.f32.mrb[0].mxu0
        %v791 = vpop.f32.mrb[0].mxu0
        %v792 = vadd.f32 0.0, %v791
        %v793 = vpop.f32.mrb[0].mxu0
        %794 = vdwg.mxu0
        %795 = vst [vmem:[%s392] sm:$0xff] %v789
        %796 = vst [vmem:[%s392 + $0x8] sm:$0xff] %v792
        %s797 = sand.u32 %s251, 1
        %s798 = scalar_lea.sflag [#allocation4], %s797
        %s799 = sand.u32 %s251, 1
        %s800 = smul.addr %s799, 16
        %s801 = scalar_lea.vmem [#allocation7], %s800
        // Predicated region
        $region69: #{tpu_custom_call.1} parent=59 // pred_check
          %p802 = pneg %p261
        $region70: #{tpu_custom_call.1} parent=59 // pred_check_branch
          %804 = sbr.rel (%p802) target = $region72
        $region71: #{tpu_custom_call.1} parent=59 // pred_region
          %s805 = smul.u32 2, %s28
          %s807 = ssub.s32 256, 256
          %808 = vsyncadd %s798, %s807
          %s809 = smul.addr %s805, 128
          %s810 = scalar_lea.hbm %s10, %s809
          %s811 = sshll.u32 %s801, 4
          %s812 = int_to_ptr.vmem [resolvable:$true] %s811
          %817 = dma.vmem_to_hbm [thread:$0]  %s812, 256, %s810, %s798, 128, 128, 8
        $region72: #{tpu_custom_call.1} parent=59 // pred_fallthru
          _
      $region60: #{tpu_custom_call.1} parent=5 // pred_fallthru
        _
      %p818 = scmp.le.s32.totalorder 2, %s23
      // Predicated region
      $region73: #{tpu_custom_call.1} parent=5 // pred_check
        %p819 = pneg %p818
      $region74: #{tpu_custom_call.1} parent=5 // pred_check_branch
        %821 = sbr.rel (%p819) target = $region76
      $region75: #{tpu_custom_call.1} parent=5 // pred_region
        %s822 = ssub.s32 %s23, 2
        // Predicated region
        $region77: #{tpu_custom_call.1} parent=75 // pred_check
          %p823 = pneg %p267
        $region78: #{tpu_custom_call.1} parent=75 // pred_check_branch
          %825 = sbr.rel (%p823) target = $region80
        $region79: #{tpu_custom_call.1} parent=75 // pred_region
          %s826 = sand.u32 %s252, 1
          %s827 = scalar_lea.sflag [#allocation4], %s826
          %s828 = sand.u32 %s252, 1
          %s829 = smul.addr %s828, 16
          %s830 = scalar_lea.vmem [#allocation7], %s829
          %831 = dma.done %s827, 256
        $region80: #{tpu_custom_call.1} parent=75 // pred_fallthru
          _
      $region76: #{tpu_custom_call.1} parent=5 // pred_fallthru
        _
    $region6: #{tpu_custom_call.1} parent=1 // loop_footer
      %s27 = sadd.s32 1, %s23
    $region7: #{tpu_custom_call.1} parent=1 // loop_footer_branch
      %22 = sbr.rel target = $region3
    $region8: #{tpu_custom_call.1} parent=1 // loop_exit
      _
    %832 = vsyncpa [#allocation3], 1
    %s833 = scalar_lea.sflag [#allocation3], 1
    %834 = vsyncpa %s833, 1
    %835 = vsyncpa [#allocation6], 1
    %836 = vsyncpa [#allocation4], 1
    %s837 = scalar_lea.sflag [#allocation4], 1
    %838 = vsyncpa %s837, 1

</llo_original>
